<compile_context>
chip_gen: v7x
topology: tpu7x:2x2x1
jax: 0.10.0
libtpu: 0.0.40
codegen_flags: <defaults>
</compile_context>

<pallas_src>
import jax
import jax.numpy as jnp
from jax.experimental import pallas as pl
from jax.experimental.pallas import tpu as pltpu


def simple_attention_kernel(feats_ref, hid_ref, mask_ref, wfold_ref, wm_ref,
                            summary_ref, dist_ref):
    # feats_ref:  (B, S, F)    batch-major; F on the lane axis
    # hid_ref:    (B, F+1)     hidden with a trailing ones column (selects the bias row)
    # mask_ref:   (B, S)
    # wfold_ref:  (F+1, F)     rows [0:F] = Wq^T @ Wk ; row F = bq @ Wk
    # wm_ref:     (F+1, H)     rows [0:F] = Wm^T      ; row F = bm
    B, S, F = feats_ref.shape
    feats = feats_ref[...]                                               # (B, S, F)

    # qk[b,:] = Wk^T (Wq hidden[b] + bq)  — single fused matmul (Wq folded in wrapper).
    qk = jnp.dot(hid_ref[...], wfold_ref[...],
                 preferred_element_type=jnp.float32)                     # (B, F)

    # scores[b,s] = feats[b,s,:]·qk[b,:] + mask*(-99999).
    # The per-batch constant query·bk is uniform over S and softmax over S is
    # shift-invariant, so it is dropped (exact, not an approximation).
    scores = jnp.sum(feats * qk[:, None, :], axis=-1)                    # (B, S)
    scores = scores + mask_ref[...] * (-99999.0)

    # Softmax over S (last/lane axis), numerically stabilized; reciprocal on the EUP.
    m = jnp.max(scores, axis=-1, keepdims=True)
    e = jnp.exp(scores - m)
    dist = e * pl.reciprocal(jnp.sum(e, axis=-1, keepdims=True), approx=False)
    dist_ref[...] = dist                                                 # (B, S)

    # Contract over S BEFORE the memory projection (dist sums to 1 along S, so the
    # bias row of wm_ref is added exactly once).
    wf = jnp.sum(dist[:, :, None] * feats, axis=1)                       # (B, F)
    wm_all = wm_ref[...]                                                 # (F+1, H)
    summary_ref[...] = (jnp.dot(wf, wm_all[:F, :],
                                preferred_element_type=jnp.float32)
                        + wm_all[F:F + 1, :])                            # (B, H)


def simple_attention(features, hidden, mask, params):
    """features: (S, B, F), hidden: (B, F), mask: (S, B). Returns (summary, dist, copy_dist)."""
    S, B, F = features.shape
    H = params["wm"].shape[0]       # PyTorch-style weight shape (out, in)

    # Wrapper glue (tiny, one-time): batch-major features/mask, Wq folded into Wk,
    # biases appended as an extra weight row, ones column appended to hidden.
    feats_b = jnp.transpose(features, (1, 0, 2))                          # (B, S, F)
    mask_b = mask.T                                                       # (B, S)

    w_fold = params["wq"].T @ params["wk"]                                # (F, F)
    b_fold = params["bq"] @ params["wk"]                                  # (F,)
    wfold_aug = jnp.concatenate([w_fold, b_fold[None, :]], axis=0)        # (F+1, F)
    wm_aug = jnp.concatenate([params["wm"].T, params["bm"][None, :]], axis=0)  # (F+1, H)
    hid_aug = jnp.concatenate([hidden, jnp.ones((B, 1), hidden.dtype)], axis=1)  # (B, F+1)

    vmem = pl.BlockSpec(memory_space=pltpu.MemorySpace.VMEM)
    summary_bh, dist_bs = pl.pallas_call(
        simple_attention_kernel,
        out_shape=(jax.ShapeDtypeStruct((B, H), jnp.float32),
                   jax.ShapeDtypeStruct((B, S), jnp.float32)),
        in_specs=[vmem] * 5,
        out_specs=(vmem, vmem),
    )(feats_b, hid_aug, mask_b, wfold_aug, wm_aug)

    summary = summary_bh[None, :, :]                                      # (1, B, H)
    dist = dist_bs.T                                                      # (S, B)
    return summary, dist, dist   # copy=False -> copy_distribution is distribution


def _init_linear(key, n_in, n_out):
    """Deterministic nn.Linear-style init: U(-1/sqrt(in), 1/sqrt(in))."""
    kw, kb = jax.random.split(key)
    bound = 1.0 / jnp.sqrt(jnp.float32(n_in))
    w = jax.random.uniform(kw, (n_out, n_in), jnp.float32, -bound, bound)
    b = jax.random.uniform(kb, (n_out,), jnp.float32, -bound, bound)
    return w, b


def _reference(features, hidden, mask, params):
    key = features @ params["wk"].T + params["bk"]
    memory = features @ params["wm"].T + params["bm"]
    query = (hidden @ params["wq"].T + params["bq"])[None, :, :]
    scores = jnp.sum(key * query, axis=2) + mask * (-99999.0)
    dist = jax.nn.softmax(scores, axis=0)
    summary = jnp.sum(memory * dist[:, :, None], axis=0, keepdims=True)
    return summary, dist, dist


if __name__ == "__main__":
    S, B, F, H = 8, 4, 32, 32   # seq_len, batch, n_features, n_hidden

    root = jax.random.PRNGKey(0)
    k_feat, k_hid, k_k, k_q, k_m = jax.random.split(root, 5)

    features = jax.random.normal(k_feat, (S, B, F), jnp.float32)
    hidden = jax.random.normal(k_hid, (B, F), jnp.float32)
    # mask: 1.0 where positions should be suppressed (last two timesteps).
    mask = jnp.zeros((S, B), jnp.float32).at[S - 2:, :].set(1.0)

    wk, bk = _init_linear(k_k, F, H)
    wq, bq = _init_linear(k_q, F, H)   # copy=False -> (1 + 0) * H outputs
    wm, bm = _init_linear(k_m, F, H)
    params = {"wk": wk, "bk": bk, "wq": wq, "bq": bq, "wm": wm, "bm": bm}

    summary, dist, copy_dist = simple_attention(features, hidden, mask, params)
    jax.block_until_ready((summary, dist, copy_dist))

    ref_summary, ref_dist, _ = _reference(features, hidden, mask, params)
    assert summary.shape == (1, B, H) and dist.shape == (S, B)
    assert jnp.allclose(summary, ref_summary, rtol=1e-4, atol=1e-4)
    assert jnp.allclose(dist, ref_dist, rtol=1e-4, atol=1e-4)

    # TODO(synk): copy=True branch (chunked scores + separate copy softmax) not implemented;
    # this kernel fixes the config to key=True, query=True, memory=True, copy=False.
    # TODO(synk): production-S path: S-tiled grid with online softmax + running (B,F)
    # accumulator, bf16 matmul operands, dot_general contractions, transpose-free input
    # consumption, lane-dense outputs, and dimension_semantics=("parallel",...,"arbitrary").
    print("KERNEL_OK")
</pallas_src>

<mosaic_0001>
module attributes {stable_mosaic.version = 11 : i64} {
  func.func @simple_attention_kernel(%arg0: memref<4x8x32xf32, #tpu.memory_space<vmem>>, %arg1: memref<4x33xf32, #tpu.memory_space<vmem>>, %arg2: memref<4x8xf32, #tpu.memory_space<vmem>>, %arg3: memref<33x32xf32, #tpu.memory_space<vmem>>, %arg4: memref<33x32xf32, #tpu.memory_space<vmem>>, %arg5: memref<4x32xf32, #tpu.memory_space<vmem>>, %arg6: memref<4x8xf32, #tpu.memory_space<vmem>>) attributes {dimension_semantics = [], scalar_prefetch = 0 : i64, scratch_operands = 0 : i64, tpu.core_type = #tpu.core_type<tc>} {
    %c0 = arith.constant 0 : index
    %c0_0 = arith.constant 0 : index
    %c0_1 = arith.constant 0 : index
    %0 = vector.load %arg0[%c0, %c0_0, %c0_1] : memref<4x8x32xf32, #tpu.memory_space<vmem>>, vector<4x8x32xf32>
    %c0_2 = arith.constant 0 : index
    %c0_3 = arith.constant 0 : index
    %1 = vector.load %arg1[%c0_2, %c0_3] : memref<4x33xf32, #tpu.memory_space<vmem>>, vector<4x33xf32>
    %c0_4 = arith.constant 0 : index
    %c0_5 = arith.constant 0 : index
    %2 = vector.load %arg3[%c0_4, %c0_5] : memref<33x32xf32, #tpu.memory_space<vmem>>, vector<33x32xf32>
    %cst = arith.constant dense<0.000000e+00> : vector<4x32xf32>
    %3 = tpu.matmul %1, %2, %cst {dimension_numbers = #tpu.dot_dimension_numbers<[1], [0], [0], [1], [0, 0, 1, 1], [], []>} : vector<4x33xf32>, vector<33x32xf32>, vector<4x32xf32> -> vector<4x32xf32>
    %4 = vector.shape_cast %3 : vector<4x32xf32> to vector<4x1x32xf32>
    %5 = vector.broadcast %4 : vector<4x1x32xf32> to vector<4x8x32xf32>
    %6 = arith.mulf %0, %5 : vector<4x8x32xf32>
    %cst_6 = arith.constant dense<0.000000e+00> : vector<4x8xf32>
    %7 = vector.multi_reduction <add>, %6, %cst_6 [2] : vector<4x8x32xf32> to vector<4x8xf32>
    %c0_7 = arith.constant 0 : index
    %c0_8 = arith.constant 0 : index
    %8 = vector.load %arg2[%c0_7, %c0_8] : memref<4x8xf32, #tpu.memory_space<vmem>>, vector<4x8xf32>
    %cst_9 = arith.constant -9.999900e+04 : f32
    %9 = vector.broadcast %cst_9 : f32 to vector<4x8xf32>
    %10 = arith.mulf %8, %9 : vector<4x8xf32>
    %11 = arith.addf %7, %10 : vector<4x8xf32>
    %cst_10 = arith.constant dense<0xFF800000> : vector<4xf32>
    %12 = vector.multi_reduction <maximumf>, %11, %cst_10 [1] : vector<4x8xf32> to vector<4xf32>
    %13 = vector.shape_cast %12 : vector<4xf32> to vector<4x1xf32>
    %14 = vector.broadcast %13 : vector<4x1xf32> to vector<4x8xf32>
    %15 = arith.subf %11, %14 : vector<4x8xf32>
    %16 = math.exp %15 : vector<4x8xf32>
    %cst_11 = arith.constant dense<0.000000e+00> : vector<4xf32>
    %17 = vector.multi_reduction <add>, %16, %cst_11 [1] : vector<4x8xf32> to vector<4xf32>
    %18 = vector.shape_cast %17 : vector<4xf32> to vector<4x1xf32>
    %19 = tpu.reciprocal %18 : vector<4x1xf32> -> vector<4x1xf32>
    %20 = vector.broadcast %19 : vector<4x1xf32> to vector<4x8xf32>
    %21 = arith.mulf %16, %20 : vector<4x8xf32>
    %c0_12 = arith.constant 0 : index
    %c0_13 = arith.constant 0 : index
    %22 = vector.load %arg6[%c0_12, %c0_13] : memref<4x8xf32, #tpu.memory_space<vmem>>, vector<4x8xf32>
    tpu.vector_store %arg6[%c0_12, %c0_13], %21 {strides = array<i32>} : memref<4x8xf32, #tpu.memory_space<vmem>>, vector<4x8xf32>,
    %23 = vector.shape_cast %21 : vector<4x8xf32> to vector<4x8x1xf32>
    %24 = vector.broadcast %23 : vector<4x8x1xf32> to vector<4x8x32xf32>
    %25 = arith.mulf %24, %0 : vector<4x8x32xf32>
    %cst_14 = arith.constant dense<0.000000e+00> : vector<4x32xf32>
    %26 = vector.multi_reduction <add>, %25, %cst_14 [1] : vector<4x8x32xf32> to vector<4x32xf32>
    %c0_15 = arith.constant 0 : index
    %c0_16 = arith.constant 0 : index
    %27 = vector.load %arg4[%c0_15, %c0_16] : memref<33x32xf32, #tpu.memory_space<vmem>>, vector<33x32xf32>
    %28 = vector.extract_strided_slice %27 {offsets = [0, 0], sizes = [32, 32], strides = [1, 1]} : vector<33x32xf32> to vector<32x32xf32>
    %cst_17 = arith.constant dense<0.000000e+00> : vector<4x32xf32>
    %29 = tpu.matmul %26, %28, %cst_17 {dimension_numbers = #tpu.dot_dimension_numbers<[1], [0], [0], [1], [0, 0, 1, 1], [], []>} : vector<4x32xf32>, vector<32x32xf32>, vector<4x32xf32> -> vector<4x32xf32>
    %30 = vector.extract_strided_slice %27 {offsets = [32, 0], sizes = [1, 32], strides = [1, 1]} : vector<33x32xf32> to vector<1x32xf32>
    %31 = vector.broadcast %30 : vector<1x32xf32> to vector<4x32xf32>
    %32 = arith.addf %29, %31 : vector<4x32xf32>
    %c0_18 = arith.constant 0 : index
    %c0_19 = arith.constant 0 : index
    %33 = vector.load %arg5[%c0_18, %c0_19] : memref<4x32xf32, #tpu.memory_space<vmem>>, vector<4x32xf32>
    tpu.vector_store %arg5[%c0_18, %c0_19], %32 {strides = array<i32>} : memref<4x32xf32, #tpu.memory_space<vmem>>, vector<4x32xf32>,
    return
  }
}

</mosaic_0001>

<llo_original>
// kernel: tpu_custom_call.1
$region0: #{tpu_custom_call.1}
  #allocation0 [shape = 'u32[]', space=smem, size = 0x4, offset = 0x4, fixed_abs, tag = 'smem constant byte address 0x4 - core index']
  #allocation1 [shape = 'u32[144,128]{1,0:T(1,128)}', space=vmem, size = 0x12000, scoped, tag = 'internal scratch']
  %s0 = inlined_call_operand.vmem [shape: f32[4,8,32], index: 0, kind: input, shape index: {}]
  %s1 = inlined_call_operand.vmem [shape: f32[4,33], index: 1, kind: input, shape index: {}]
  %s2 = inlined_call_operand.vmem [shape: f32[4,8], index: 2, kind: input, shape index: {}]
  %s3 = inlined_call_operand.vmem [shape: f32[33,32], index: 3, kind: input, shape index: {}]
  %s4 = inlined_call_operand.vmem [shape: f32[33,32], index: 4, kind: input, shape index: {}]
  %s5 = inlined_call_operand.hbm [shape: f32[4,32], index: 5, kind: output, shape index: {0}]
  %s6 = inlined_call_operand.hbm [shape: f32[4,8], index: 6, kind: output, shape index: {1}]
  %7 = xla_tuple %s5, %s6
  %s8 = sld [smem:[#allocation0]]
  $region38: #{tpu_custom_call.1} parent=0
    _
  %s10 = ssub.s32 1, %s8
  %s11 = scalar_select 0, %s10, %s8
  $region1: #{tpu_custom_call.1} parent=0
    #allocation2 [shape = 'u8[2048]{0}', space=vmem, size = 0x800, scoped, tag = 'output window, operand 0, single buffered']
    #allocation3 [shape = 's32[1]{0}', space=sflag, size = 0x4, scoped, tag = 'scoped memory for tpu_custom_call.1']
    #allocation4 [shape = 'u8[2048]{0}', space=vmem, size = 0x800, scoped, tag = 'output window, operand 1, single buffered']
    #allocation5 [shape = 's32[1]{0}', space=sflag, size = 0x4, scoped, tag = 'scoped memory for tpu_custom_call.1']
    %12 = vsyncpa [#allocation3], 0
    %13 = vsyncpa [#allocation5], 0
    // Predicated region
    $region2: #{tpu_custom_call.1} parent=1 // pred_check
      _
    $region3: #{tpu_custom_call.1} parent=1 // pred_check_branch
      %15 = sbr.rel (0) target = $region5
    $region4: #{tpu_custom_call.1} parent=1 // pred_region
      _
    $region5: #{tpu_custom_call.1} parent=1 // pred_fallthru
      _
    // Predicated region
    $region6: #{tpu_custom_call.1} parent=1 // pred_check
      _
    $region7: #{tpu_custom_call.1} parent=1 // pred_check_branch
      %17 = sbr.rel (0) target = $region9
    $region8: #{tpu_custom_call.1} parent=1 // pred_region
      _
    $region9: #{tpu_custom_call.1} parent=1 // pred_fallthru
      _
    // Predicated region
    $region10: #{tpu_custom_call.1} parent=1 // pred_check
      _
    $region11: #{tpu_custom_call.1} parent=1 // pred_check_branch
      %19 = sbr.rel (0) target = $region13
    $region12: #{tpu_custom_call.1} parent=1 // pred_region
      _
    $region13: #{tpu_custom_call.1} parent=1 // pred_fallthru
      _
    // Predicated region
    $region14: #{tpu_custom_call.1} parent=1 // pred_check
      _
    $region15: #{tpu_custom_call.1} parent=1 // pred_check_branch
      %21 = sbr.rel (0) target = $region17
    $region16: #{tpu_custom_call.1} parent=1 // pred_region
      _
    $region17: #{tpu_custom_call.1} parent=1 // pred_fallthru
      _
    // Predicated region
    $region18: #{tpu_custom_call.1} parent=1 // pred_check
      _
    $region19: #{tpu_custom_call.1} parent=1 // pred_check_branch
      %23 = sbr.rel (0) target = $region21
    $region20: #{tpu_custom_call.1} parent=1 // pred_region
      _
    $region21: #{tpu_custom_call.1} parent=1 // pred_fallthru
      _
    %v24 = vld [vmem:[%s0] sm:$0xff]
    %v25 = vld [vmem:[%s0 + $0x8] sm:$0xff]
    %v26 = vld [vmem:[%s0 + $0x10] sm:$0xff]
    %v27 = vld [vmem:[%s0 + $0x18] sm:$0xff]
    %v28 = vld [vmem:[%s1] sm:$0xf]
    %v29 = vld [vmem:[%s3] sm:$0xff]
    %v30 = vld [vmem:[%s3 + $0x8] sm:$0xff]
    %v31 = vld [vmem:[%s3 + $0x10] sm:$0xff]
    %v32 = vld [vmem:[%s3 + $0x18] sm:$0xff]
    %v33 = vld [vmem:[%s3 + $0x20] sm:$0x1]
    %vm34 = vcmask 269312
    %v36 = vsel %vm34, %v28, 0
    %vm38 = vcmask 1040384
    %v40 = vsel %vm38, %v33, 0
    %42 = vmatprep.subr.mxu0 0.0
    %43 = vmatpush1.msra.mxu0 %v29
    %44 = vmatprep.subr.mxu0 0.0
    %45 = vmatpush1.msra.mxu0 %v30
    %46 = vmatprep.subr.mxu0 0.0
    %47 = vmatpush1.msra.mxu0 %v31
    %48 = vmatprep.subr.mxu0 0.0
    %49 = vmatpush1.msra.mxu0 %v32
    %50 = vmatprep.subr.mxu0 0.0
    %51 = vmatpush1.msra.mxu0 %v40
    %52 = vmatprep.subr.mxu0 0.0
    %53 = vmatpush1.msra.mxu0 0.0
    %54 = vmatprep.subr.mxu0 0.0
    %55 = vmatpush1.msra.mxu0 0.0
    %56 = vmatprep.subr.mxu0 0.0
    %57 = vmatpush1.msra.mxu0 0.0
    %58 = vmatprep.subr.mxu0 0.0
    %59 = vmatpush1.msra.mxu0 0.0
    %60 = vmatprep.subr.mxu0 0.0
    %61 = vmatpush1.msra.mxu0 0.0
    %62 = vmatprep.subr.mxu0 0.0
    %63 = vmatpush1.msra.mxu0 0.0
    %64 = vmatprep.subr.mxu0 0.0
    %65 = vmatpush1.msra.mxu0 0.0
    %66 = vmatprep.subr.mxu0 0.0
    %67 = vmatpush1.msra.mxu0 0.0
    %68 = vmatprep.subr.mxu0 0.0
    %69 = vmatpush1.msra.mxu0 0.0
    %70 = vmatprep.subr.mxu0 0.0
    %71 = vmatpush1.msra.mxu0 0.0
    %72 = vmatprep.subr.mxu0 0.0
    %73 = vmatpush1.msra.mxu0 0.0
    %74 = vmatprep.subr.mxu0 0.0
    %75 = vmatpush1.msra.mxu0 0.0
    %76 = vmatprep.subr.mxu0 0.0
    %77 = vmatpush1.msra.mxu0 0.0
    %78 = vmatprep.subr.mxu0 0.0
    %79 = vmatpush1.msra.mxu0 0.0
    %80 = vmatprep.subr.mxu0 0.0
    %81 = vmatpush1.msra.mxu0 0.0
    %82 = vmatprep.subr.mxu0 0.0
    %83 = vmatpush1.msra.mxu0 0.0
    %84 = vmatprep.subr.mxu0 0.0
    %85 = vmatpush1.msra.mxu0 0.0
    %86 = vmatprep.subr.mxu0 0.0
    %87 = vmatpush1.msra.mxu0 0.0
    %88 = vmatprep.subr.mxu0 0.0
    %89 = vmatpush1.msra.mxu0 0.0
    %90 = vmatprep.subr.mxu0 0.0
    %91 = vmatpush1.msra.mxu0 0.0
    %92 = vmatprep.subr.mxu0 0.0
    %93 = vmatpush1.msra.mxu0 0.0
    %94 = vmatprep.subr.mxu0 0.0
    %95 = vmatpush1.msra.mxu0 0.0
    %96 = vmatprep.subr.mxu0 0.0
    %97 = vmatpush1.msra.mxu0 0.0
    %98 = vmatprep.subr.mxu0 0.0
    %99 = vmatpush1.msra.mxu0 0.0
    %100 = vmatprep.subr.mxu0 0.0
    %101 = vmatpush1.msra.mxu0 0.0
    %102 = vmatprep.subr.mxu0 0.0
    %103 = vmatpush1.msra.mxu0 0.0
    %104 = vmatprep.subr.mxu0 0.0
    %105 = vmatpush1.msra.mxu0 0.0
    %106 = vmatprep.mubr.f32.mxu0 0.0
    %107 = vmatmul.mubr.f32.gmra.mrb[0].mxu0 %v36
    %v108 = vpop.f32.mrb[0].mxu0
    %v109 = vadd.f32 0.0, %v108
    %v110 = vpop.f32.mrb[0].mxu0
    %111 = vdwg.mxu0
    %v114 = vunpack.c.l.s4 1966171168
    %v115 = vunpack.c.0.s8 %v114
    %v116 = vlaneseq
    %v117 = vshrl.u32 %v116, 7
    %v118 = vsub.s32 %v115, %v117
    %v119 = vrot.slane %v109, %v118
    %v120 = vcombine.high %v119, %v119
    %v122 = vunpack.c.l.s4 1966171168
    %v123 = vunpack.c.0.s8 %v122
    %v124 = vlaneseq
    %v125 = vshrl.u32 %v124, 7
    %v126 = vsub.s32 %v123, %v125
    %v127 = vrot.slane %v119, %v126
    %v129 = vunpack.c.l.s4 1966171168
    %v130 = vunpack.c.0.s8 %v129
    %v131 = vlaneseq
    %v132 = vshrl.u32 %v131, 7
    %v133 = vsub.s32 %v130, %v132
    %v134 = vrot.slane %v120, %v133
    %v135 = vcombine.high %v127, %v127
    %v136 = vcombine.high %v134, %v134
    %v137 = vlaneseq
    %v138 = vshrl.u32 %v137, 7
    %v139 = vsub.s32 0, %v138
    %v140 = vrot.slane %v127, %v139
    %v141 = vlaneseq
    %v142 = vshrl.u32 %v141, 7
    %v143 = vsub.s32 0, %v142
    %v144 = vrot.slane %v134, %v143
    %v145 = vlaneseq
    %v146 = vshrl.u32 %v145, 7
    %v147 = vsub.s32 0, %v146
    %v148 = vrot.slane %v135, %v147
    %v149 = vlaneseq
    %v150 = vshrl.u32 %v149, 7
    %v151 = vsub.s32 0, %v150
    %v152 = vrot.slane %v136, %v151
    %v157 = vmul.f32 %v24, %v140
    %v158 = vmul.f32 %v25, %v144
    %v159 = vmul.f32 %v26, %v148
    %v160 = vmul.f32 %v27, %v152
    %vm161 = vcmask 261120
    %v162 = vsel %vm161, %v157, 0.0
    %163 = vadd.xlane.f32.xlu0 %v162
    %v164 = vpop.xlane.xlu0 %163
    %v165 = vsel %vm161, %v158, 0.0
    %166 = vadd.xlane.f32.xlu0 %v165
    %v167 = vpop.xlane.xlu0 %166
    %v168 = vsel %vm161, %v159, 0.0
    %169 = vadd.xlane.f32.xlu0 %v168
    %v170 = vpop.xlane.xlu0 %169
    %v171 = vsel %vm161, %v160, 0.0
    %172 = vadd.xlane.f32.xlu0 %v171
    %v173 = vpop.xlane.xlu0 %172
    %v174 = vld [vmem:[%s2] sm:$0xf]
    %v175 = vmul.f32 %v174, -99999.0
    %v177 = vlaneseq
    %v178 = vshrl.u32 %v177, 7
    %v179 = vsub.s32 0, %v178
    %v180 = vrot.slane %v175, %v179
    %182 = vbcast.lane.b32.xlu0 %v180, 256
    %v183 = vpop.permute.xlu0 %182
    %v184 = vlaneseq
    %v185 = vshrl.u32 %v184, 7
    %v186 = vsub.s32 1, %v185
    %v187 = vrot.slane %v175, %v186
    %189 = vbcast.lane.b32.xlu0 %v187, 256
    %v190 = vpop.permute.xlu0 %189
    %v191 = vlaneseq
    %v192 = vshrl.u32 %v191, 7
    %v193 = vsub.s32 2, %v192
    %v194 = vrot.slane %v175, %v193
    %196 = vbcast.lane.b32.xlu0 %v194, 256
    %v197 = vpop.permute.xlu0 %196
    %v198 = vlaneseq
    %v199 = vshrl.u32 %v198, 7
    %v200 = vsub.s32 3, %v199
    %v201 = vrot.slane %v175, %v200
    %203 = vbcast.lane.b32.xlu0 %v201, 256
    %v204 = vpop.permute.xlu0 %203
    %v209 = vadd.f32 %v164, %v183
    %v210 = vadd.f32 %v167, %v190
    %v211 = vadd.f32 %v170, %v197
    %v212 = vadd.f32 %v173, %v204
    %217 = vset.pattern.permute.xlu0 0
    %218 = vperm.xlu0 %217, %v209
    %v219 = vpop.permute.xlu0 %218
    %220 = vset.pattern.permute.xlu0 0
    %221 = vperm.xlu0 %220, %v210
    %v222 = vpop.permute.xlu0 %221
    %223 = vset.pattern.permute.xlu0 0
    %224 = vperm.xlu0 %223, %v211
    %v225 = vpop.permute.xlu0 %224
    %226 = vset.pattern.permute.xlu0 0
    %227 = vperm.xlu0 %226, %v212
    %v228 = vpop.permute.xlu0 %227
    %v229 = vlaneseq
    %v230 = vand.u32 %v229, 127
    %v231 = vlaneseq
    %v232 = vshrl.u32 %v231, 7
    %v233 = vsub.s32 %v230, %v232
    %v234 = vrot.slane %v219, %v233
    %v235 = vlaneseq
    %v236 = vshrl.u32 %v235, 7
    %v237 = vsub.s32 %v230, %v236
    %v238 = vrot.slane %v222, %v237
    %v239 = vlaneseq
    %v240 = vshrl.u32 %v239, 7
    %v241 = vsub.s32 %v230, %v240
    %v242 = vrot.slane %v225, %v241
    %v243 = vlaneseq
    %v244 = vshrl.u32 %v243, 7
    %v245 = vsub.s32 %v230, %v244
    %v246 = vrot.slane %v228, %v245
    %vm247 = vcmask 1041409
    %v248 = vsel %vm247, %v238, %v234
    %vm249 = vcmask 1042434
    %v250 = vsel %vm249, %v242, %v248
    %vm251 = vcmask 1043459
    %v252 = vsel %vm251, %v246, %v250
    %vm254 = vcmask 60416
    %v255 = vsel %vm254, %v252, -inf
    %256 = vmax.xlane.f32.xlu0 %v255
    %v257 = vpop.xlane.xlu0 %256
    %v259 = vlaneseq
    %v260 = vshrl.u32 %v259, 7
    %v261 = vsub.s32 0, %v260
    %v262 = vrot.slane %v257, %v261
    %v263 = vlaneseq
    %v264 = vshrl.u32 %v263, 7
    %v265 = vsub.s32 1, %v264
    %v266 = vrot.slane %v257, %v265
    %v267 = vlaneseq
    %v268 = vshrl.u32 %v267, 7
    %v269 = vsub.s32 2, %v268
    %v270 = vrot.slane %v257, %v269
    %v271 = vlaneseq
    %v272 = vshrl.u32 %v271, 7
    %v273 = vsub.s32 3, %v272
    %v274 = vrot.slane %v257, %v273
    %v279 = vsub.f32 %v209, %v262
    %v280 = vsub.f32 %v210, %v266
    %v281 = vsub.f32 %v211, %v270
    %v282 = vsub.f32 %v212, %v274
    %v283 = vmul.f32 %v279, 1.442695
    %v284 = vpow.pop %v283
    %v285 = vmul.f32 %v280, 1.442695
    %v286 = vpow.pop %v285
    %v287 = vmul.f32 %v281, 1.442695
    %v288 = vpow.pop %v287
    %v289 = vmul.f32 %v282, 1.442695
    %v290 = vpow.pop %v289
    %295 = vset.pattern.permute.xlu0 0
    %296 = vperm.xlu0 %295, %v284
    %v297 = vpop.permute.xlu0 %296
    %298 = vset.pattern.permute.xlu0 0
    %299 = vperm.xlu0 %298, %v286
    %v300 = vpop.permute.xlu0 %299
    %301 = vset.pattern.permute.xlu0 0
    %302 = vperm.xlu0 %301, %v288
    %v303 = vpop.permute.xlu0 %302
    %304 = vset.pattern.permute.xlu0 0
    %305 = vperm.xlu0 %304, %v290
    %v306 = vpop.permute.xlu0 %305
    %v307 = vlaneseq
    %v308 = vshrl.u32 %v307, 7
    %v309 = vsub.s32 %v230, %v308
    %v310 = vrot.slane %v297, %v309
    %v311 = vlaneseq
    %v312 = vshrl.u32 %v311, 7
    %v313 = vsub.s32 %v230, %v312
    %v314 = vrot.slane %v300, %v313
    %v315 = vlaneseq
    %v316 = vshrl.u32 %v315, 7
    %v317 = vsub.s32 %v230, %v316
    %v318 = vrot.slane %v303, %v317
    %v319 = vlaneseq
    %v320 = vshrl.u32 %v319, 7
    %v321 = vsub.s32 %v230, %v320
    %v322 = vrot.slane %v306, %v321
    %v323 = vsel %vm247, %v314, %v310
    %v324 = vsel %vm249, %v318, %v323
    %v325 = vsel %vm251, %v322, %v324
    %v327 = vsel %vm254, %v325, 0.0
    %328 = vadd.xlane.f32.xlu0 %v327
    %v329 = vpop.xlane.xlu0 %328
    %v330 = vrcp.pop %v329
    %v332 = vlaneseq
    %v333 = vshrl.u32 %v332, 7
    %v334 = vsub.s32 0, %v333
    %v335 = vrot.slane %v330, %v334
    %v336 = vlaneseq
    %v337 = vshrl.u32 %v336, 7
    %v338 = vsub.s32 1, %v337
    %v339 = vrot.slane %v330, %v338
    %v340 = vlaneseq
    %v341 = vshrl.u32 %v340, 7
    %v342 = vsub.s32 2, %v341
    %v343 = vrot.slane %v330, %v342
    %v344 = vlaneseq
    %v345 = vshrl.u32 %v344, 7
    %v346 = vsub.s32 3, %v345
    %v347 = vrot.slane %v330, %v346
    %v352 = vmul.f32 %v284, %v335
    %v353 = vmul.f32 %v286, %v339
    %v354 = vmul.f32 %v288, %v343
    %v355 = vmul.f32 %v290, %v347
    %360 = vset.pattern.permute.xlu0 0
    %361 = vperm.xlu0 %360, %v352
    %v362 = vpop.permute.xlu0 %361
    %363 = vset.pattern.permute.xlu0 0
    %364 = vperm.xlu0 %363, %v353
    %v365 = vpop.permute.xlu0 %364
    %366 = vset.pattern.permute.xlu0 0
    %367 = vperm.xlu0 %366, %v354
    %v368 = vpop.permute.xlu0 %367
    %369 = vset.pattern.permute.xlu0 0
    %370 = vperm.xlu0 %369, %v355
    %v371 = vpop.permute.xlu0 %370
    %v372 = vlaneseq
    %v373 = vshrl.u32 %v372, 7
    %v374 = vsub.s32 %v230, %v373
    %v375 = vrot.slane %v362, %v374
    %v376 = vlaneseq
    %v377 = vshrl.u32 %v376, 7
    %v378 = vsub.s32 %v230, %v377
    %v379 = vrot.slane %v365, %v378
    %v380 = vlaneseq
    %v381 = vshrl.u32 %v380, 7
    %v382 = vsub.s32 %v230, %v381
    %v383 = vrot.slane %v368, %v382
    %v384 = vlaneseq
    %v385 = vshrl.u32 %v384, 7
    %v386 = vsub.s32 %v230, %v385
    %v387 = vrot.slane %v371, %v386
    %v388 = vsel %vm247, %v379, %v375
    %v389 = vsel %vm249, %v383, %v388
    %v390 = vsel %vm251, %v387, %v389
    %392 = vst.msk [vmem:[#allocation4] sm:$0xf] %vm254, %v390
    %v397 = vmul.f32 %v362, %v24
    %v398 = vmul.f32 %v365, %v25
    %v399 = vmul.f32 %v368, %v26
    %v400 = vmul.f32 %v371, %v27
    %v401 = vsel %vm161, %v397, 0.0
    %v402 = vrot.slane %v401, 4
    %v403 = vadd.f32 %v401, %v402
    %v404 = vrot.slane %v403, 2
    %v405 = vadd.f32 %v403, %v404
    %v406 = vrot.slane %v405, 1
    %v407 = vadd.f32 %v405, %v406
    %v408 = vsel %vm161, %v398, 0.0
    %v409 = vrot.slane %v408, 4
    %v410 = vadd.f32 %v408, %v409
    %v411 = vrot.slane %v410, 2
    %v412 = vadd.f32 %v410, %v411
    %v413 = vrot.slane %v412, 1
    %v414 = vadd.f32 %v412, %v413
    %v415 = vsel %vm161, %v399, 0.0
    %v416 = vrot.slane %v415, 4
    %v417 = vadd.f32 %v415, %v416
    %v418 = vrot.slane %v417, 2
    %v419 = vadd.f32 %v417, %v418
    %v420 = vrot.slane %v419, 1
    %v421 = vadd.f32 %v419, %v420
    %v422 = vsel %vm161, %v400, 0.0
    %v423 = vrot.slane %v422, 4
    %v424 = vadd.f32 %v422, %v423
    %v425 = vrot.slane %v424, 2
    %v426 = vadd.f32 %v424, %v425
    %v427 = vrot.slane %v426, 1
    %v428 = vadd.f32 %v426, %v427
    %v429 = vld [vmem:[%s4] sm:$0xff]
    %v430 = vld [vmem:[%s4 + $0x8] sm:$0xff]
    %v431 = vld [vmem:[%s4 + $0x10] sm:$0xff]
    %v432 = vld [vmem:[%s4 + $0x18] sm:$0xff]
    %v433 = vld [vmem:[%s4 + $0x20] sm:$0x1]
    %v434 = vlaneseq
    %v435 = vshrl.u32 %v434, 7
    %v436 = vsub.s32 0, %v435
    %v437 = vrot.slane %v433, %v436
    %v442 = vsel %vm247, %v414, %v407
    %v443 = vsel %vm249, %v421, %v442
    %v444 = vsel %vm251, %v428, %v443
    %v445 = vsel %vm161, %v444, 0
    %447 = vmatprep.subr.mxu0 0.0
    %448 = vmatpush1.msra.mxu0 %v429
    %449 = vmatprep.subr.mxu0 0.0
    %450 = vmatpush1.msra.mxu0 %v430
    %451 = vmatprep.subr.mxu0 0.0
    %452 = vmatpush1.msra.mxu0 %v431
    %453 = vmatprep.subr.mxu0 0.0
    %454 = vmatpush1.msra.mxu0 %v432
    %455 = vmatprep.subr.mxu0 0.0
    %456 = vmatpush1.msra.mxu0 0.0
    %457 = vmatprep.subr.mxu0 0.0
    %458 = vmatpush1.msra.mxu0 0.0
    %459 = vmatprep.subr.mxu0 0.0
    %460 = vmatpush1.msra.mxu0 0.0
    %461 = vmatprep.subr.mxu0 0.0
    %462 = vmatpush1.msra.mxu0 0.0
    %463 = vmatprep.subr.mxu0 0.0
    %464 = vmatpush1.msra.mxu0 0.0
    %465 = vmatprep.subr.mxu0 0.0
    %466 = vmatpush1.msra.mxu0 0.0
    %467 = vmatprep.subr.mxu0 0.0
    %468 = vmatpush1.msra.mxu0 0.0
    %469 = vmatprep.subr.mxu0 0.0
    %470 = vmatpush1.msra.mxu0 0.0
    %471 = vmatprep.subr.mxu0 0.0
    %472 = vmatpush1.msra.mxu0 0.0
    %473 = vmatprep.subr.mxu0 0.0
    %474 = vmatpush1.msra.mxu0 0.0
    %475 = vmatprep.subr.mxu0 0.0
    %476 = vmatpush1.msra.mxu0 0.0
    %477 = vmatprep.subr.mxu0 0.0
    %478 = vmatpush1.msra.mxu0 0.0
    %479 = vmatprep.subr.mxu0 0.0
    %480 = vmatpush1.msra.mxu0 0.0
    %481 = vmatprep.subr.mxu0 0.0
    %482 = vmatpush1.msra.mxu0 0.0
    %483 = vmatprep.subr.mxu0 0.0
    %484 = vmatpush1.msra.mxu0 0.0
    %485 = vmatprep.subr.mxu0 0.0
    %486 = vmatpush1.msra.mxu0 0.0
    %487 = vmatprep.subr.mxu0 0.0
    %488 = vmatpush1.msra.mxu0 0.0
    %489 = vmatprep.subr.mxu0 0.0
    %490 = vmatpush1.msra.mxu0 0.0
    %491 = vmatprep.subr.mxu0 0.0
    %492 = vmatpush1.msra.mxu0 0.0
    %493 = vmatprep.subr.mxu0 0.0
    %494 = vmatpush1.msra.mxu0 0.0
    %495 = vmatprep.subr.mxu0 0.0
    %496 = vmatpush1.msra.mxu0 0.0
    %497 = vmatprep.subr.mxu0 0.0
    %498 = vmatpush1.msra.mxu0 0.0
    %499 = vmatprep.subr.mxu0 0.0
    %500 = vmatpush1.msra.mxu0 0.0
    %501 = vmatprep.subr.mxu0 0.0
    %502 = vmatpush1.msra.mxu0 0.0
    %503 = vmatprep.subr.mxu0 0.0
    %504 = vmatpush1.msra.mxu0 0.0
    %505 = vmatprep.subr.mxu0 0.0
    %506 = vmatpush1.msra.mxu0 0.0
    %507 = vmatprep.subr.mxu0 0.0
    %508 = vmatpush1.msra.mxu0 0.0
    %509 = vmatprep.subr.mxu0 0.0
    %510 = vmatpush1.msra.mxu0 0.0
    %511 = vmatprep.mubr.f32.mxu0 0.0
    %512 = vmatmul.mubr.f32.gmra.mrb[0].mxu0 %v445
    %v513 = vpop.f32.mrb[0].mxu0
    %v514 = vadd.f32 %v437, %v513
    %v515 = vpop.f32.mrb[0].mxu0
    %516 = vdwg.mxu0
    %vm517 = vcmask 257024
    %518 = vst.msk [vmem:[#allocation2] sm:$0xf] %vm517, %v514
    // Predicated region
    $region22: #{tpu_custom_call.1} parent=1 // pred_check
      _
    $region23: #{tpu_custom_call.1} parent=1 // pred_check_branch
      %520 = sbr.rel (0) target = $region25
    $region24: #{tpu_custom_call.1} parent=1 // pred_region
      %s522 = ssub.s32 64, 64
      %523 = vsyncadd [#allocation3], %s522
      %s525 = sshll.u32 [#allocation2], 4
      %s526 = int_to_ptr.vmem [resolvable:$true] %s525
      %528 = dma.vmem_to_hbm [thread:$0]  %s526, 64, %s5, [#allocation3]
    $region25: #{tpu_custom_call.1} parent=1 // pred_fallthru
      _
    // Predicated region
    $region26: #{tpu_custom_call.1} parent=1 // pred_check
      _
    $region27: #{tpu_custom_call.1} parent=1 // pred_check_branch
      %530 = sbr.rel (0) target = $region29
    $region28: #{tpu_custom_call.1} parent=1 // pred_region
      %s532 = ssub.s32 64, 64
      %533 = vsyncadd [#allocation5], %s532
      %s535 = sshll.u32 [#allocation4], 4
      %s536 = int_to_ptr.vmem [resolvable:$true] %s535
      %538 = dma.vmem_to_hbm [thread:$0]  %s536, 64, %s6, [#allocation5]
    $region29: #{tpu_custom_call.1} parent=1 // pred_fallthru
      _
    // Predicated region
    $region30: #{tpu_custom_call.1} parent=1 // pred_check
      _
    $region31: #{tpu_custom_call.1} parent=1 // pred_check_branch
      %540 = sbr.rel (0) target = $region33
    $region32: #{tpu_custom_call.1} parent=1 // pred_region
      %541 = dma.done [#allocation3], 64
    $region33: #{tpu_custom_call.1} parent=1 // pred_fallthru
      _
    // Predicated region
    $region34: #{tpu_custom_call.1} parent=1 // pred_check
      _
    $region35: #{tpu_custom_call.1} parent=1 // pred_check_branch
      %543 = sbr.rel (0) target = $region37
    $region36: #{tpu_custom_call.1} parent=1 // pred_region
      %544 = dma.done [#allocation5], 64
    $region37: #{tpu_custom_call.1} parent=1 // pred_fallthru
      _
    %545 = vsyncpa [#allocation3], 1
    %546 = vsyncpa [#allocation5], 1

</llo_original>
